<compile_context>
chip_gen: v5e
topology: v5e:2x2
jax: 0.10.0
libtpu: 0.0.40
codegen_flags: <defaults>
</compile_context>

<pallas_src>
import functools

import jax
import jax.numpy as jnp
from jax.experimental import pallas as pl
from jax.experimental.pallas import tpu as pltpu  # noqa: F401  (kept for parity with prod code)

# ----------------------------- configuration -------------------------------
BATCH = 2
N_INPUTS = 4          # n_inputs  (input channels)
N_OUTPUTS = 8         # n_outputs (output channels) != n_inputs -> 1x1 downsample
SEQ_LEN = 16          # seq_len
KERNEL_SIZE = 3
STRIDE = 1
DILATION = 2
PADDING = (KERNEL_SIZE - 1) * DILATION   # causal padding; Chomp1d(padding) keeps seq_len
DROPOUT = 0.2                            # eval mode -> identity


# ------------------------------ Pallas kernel -------------------------------
def _temporal_block_kernel(xcol_ref, x0_ref, w1c_ref, b1_ref, w2_ref, b2_ref,
                           *rest, B, L, P, d, k, Cout, has_down):
    """Fused TemporalBlock forward for the WHOLE batch (single invocation).

    xcol_ref : (B*(L+P), k*Cin)  extended causal im2col of the input
               row (b*(L+P) + r) holds the k dilated taps for pre-chomp
               output position r of batch b (rows r < P are the causal pad).
    x0_ref   : (B*L, Cin)        unpadded input rows (residual path)
    w1c_ref  : (k*Cin, Cout)     stacked (weight-normed) conv1 weight
    b1_ref   : (1, Cout)         conv1 bias (f32)
    w2_ref   : (k, Cout, Cout)   conv2 taps, W2[j][c, o] = w2[o, c, j]
    b2_ref   : (1, Cout)         conv2 bias (f32)
    [wd_ref  : (Cin, Cout), bd_ref: (1, Cout)]   optional 1x1 downsample
    o_ref    : (B, L, Cout)      output (f32)
    """
    if has_down:
        wd_ref, bd_ref, o_ref = rest
    else:
        wd_ref = bd_ref = None
        (o_ref,) = rest

    Lp = L + P
    cdtype = xcol_ref.dtype

    # ---- conv1 (+ Chomp1d) for the whole batch in ONE MXU push -------------
    cand = jnp.dot(xcol_ref[...], w1c_ref[...],
                   preferred_element_type=jnp.float32) + b1_ref[...]   # (B*Lp, Cout)

    # Causal left-pad of the conv1 activation built IN REGISTERS (no scratch):
    # rows r < P inside each batch block are the Chomp1d / causal zero pad,
    # rows r >= P hold relu(conv1)[r-P].  (dropout1 = identity in eval mode)
    row = jax.lax.broadcasted_iota(jnp.int32, (B * Lp, Cout), 0)
    pad = row < P                                  # batch 0 pad rows
    for b in range(1, B):                          # static unroll (B is tiny)
        pad = jnp.logical_or(pad,
                             jnp.logical_and(row >= b * Lp, row < b * Lp + P))
    hp32 = jnp.where(pad, 0.0, jnp.maximum(cand, 0.0))                 # (B*Lp, Cout) f32
    hp = hp32.astype(cdtype)

    # ---- conv2: one MXU push per tap over ALL batch rows --------------------
    # The causal / dilated shift then becomes a static sublane slice of the
    # per-tap product (no VMEM round trip, no per-batch re-dispatch).
    w2 = w2_ref[...]                                                   # (k, Cout, Cout)
    taps = [jnp.dot(hp, w2[j], preferred_element_type=jnp.float32)     # (B*Lp, Cout)
            for j in range(k)]

    # ---- residual path: 1x1 downsample for the whole batch in one push -----
    if has_down:
        res_flat = jnp.dot(x0_ref[...], wd_ref[...],
                           preferred_element_type=jnp.float32) + bd_ref[...]
    else:
        res_flat = x0_ref[...].astype(jnp.float32)                     # Cin == Cout

    # ---- epilogue per batch element (static unroll): bias2 + relu2 (+ id
    # dropout2) + residual add + final relu, one store per batch block. ------
    for b in range(B):
        acc2 = jnp.zeros((L, Cout), jnp.float32) + b2_ref[...]
        for j in range(k):
            acc2 = acc2 + taps[j][b * Lp + j * d: b * Lp + j * d + L, :]
        h2 = jnp.maximum(acc2, 0.0)
        res = res_flat[b * L:(b + 1) * L, :]
        o_ref[b] = jnp.maximum(h2 + res, 0.0)


# ------------------------------ wrapper / glue -------------------------------
def _weight_norm(v, g):
    """PyTorch weight_norm (dim=0): w = g * v / ||v||, norm over (in, kernel)."""
    norm = jnp.sqrt(jnp.sum(v * v, axis=(1, 2), keepdims=True))
    return (g / norm) * v


def temporal_block_forward(x, params, *, kernel_size, stride, dilation, padding,
                           compute_dtype=jnp.float32):
    """x: (B, Cin, L) -> (B, Cout, L).  Eval-mode (dropout = identity)."""
    assert stride == 1
    # Chomp1d + residual add only type-check when padding is causal; padding=0
    # (kernel_size==1) would also break the PyTorch reference's x[:, :, :-0].
    assert padding == dilation * (kernel_size - 1) and padding > 0
    B, Cin, L = x.shape
    k, d, P = kernel_size, dilation, padding
    Lp = L + P

    w1 = _weight_norm(params["conv1_v"], params["conv1_g"])   # (Cout, Cin, k)
    w2 = _weight_norm(params["conv2_v"], params["conv2_g"])   # (Cout, Cout, k)
    Cout = w1.shape[0]
    has_down = "down_w" in params

    # --- tiny XLA-side layout / parameter prep (<3 KiB of plumbing) ---------
    xcl = jnp.transpose(x, (0, 2, 1)).astype(jnp.float32)      # (B, L, Cin)
    xpp = jnp.pad(xcl, ((0, 0), (2 * P, 0), (0, 0)))           # (B, L+2P, Cin)
    # Extended causal im2col: Xcol[b, r, j*Cin+i] = xpp[b, r + j*d, i].
    # Rows r >= P reproduce Conv1d(pad=P, dil=d) + Chomp1d(P) exactly; rows
    # r < P are the causal pad region and are zeroed inside the kernel.
    xcol = jnp.concatenate([xpp[:, j * d: j * d + Lp, :] for j in range(k)],
                           axis=-1)                            # (B, Lp, k*Cin)
    xcol = xcol.reshape(B * Lp, k * Cin).astype(compute_dtype)
    x0 = xcl.reshape(B * L, Cin).astype(compute_dtype)

    w1col = jnp.concatenate([w1[:, :, j].T for j in range(k)],
                            axis=0).astype(compute_dtype)      # (k*Cin, Cout)
    w2t = jnp.transpose(w2, (2, 1, 0)).astype(compute_dtype)   # (k, Cout, Cout)
    b1 = params["conv1_b"].reshape(1, Cout).astype(jnp.float32)
    b2 = params["conv2_b"].reshape(1, Cout).astype(jnp.float32)

    operands = [xcol, x0, w1col, b1, w2t, b2]
    if has_down:
        operands += [params["down_w"][:, :, 0].T.astype(compute_dtype),
                     params["down_b"].reshape(1, Cout).astype(jnp.float32)]

    kernel = functools.partial(_temporal_block_kernel, B=B, L=L, P=P, d=d, k=k,
                               Cout=Cout, has_down=has_down)

    # Single invocation: no grid, no per-step pipeline overhead, no scratch;
    # every operand is a whole-array VMEM block (total working set < 10 KiB).
    out = pl.pallas_call(
        kernel,
        out_shape=jax.ShapeDtypeStruct((B, L, Cout), jnp.float32),
    )(*operands)
    return jnp.transpose(out, (0, 2, 1))            # back to PyTorch (B, Cout, L)


# ------------------------------ pure-JAX reference ---------------------------
def temporal_block_ref(x, params, *, kernel_size, dilation, padding):
    del kernel_size

    def conv1d(h, w, bias, pad, dil):
        out = jax.lax.conv_general_dilated(
            h, w, window_strides=(1,), padding=[(pad, pad)], rhs_dilation=(dil,),
            dimension_numbers=("NCH", "OIH", "NCH"))
        return out + bias[None, :, None]

    w1 = _weight_norm(params["conv1_v"], params["conv1_g"])
    w2 = _weight_norm(params["conv2_v"], params["conv2_g"])
    h = conv1d(x, w1, params["conv1_b"], padding, dilation)[:, :, :-padding]   # Chomp1d
    h = jax.nn.relu(h)
    h = conv1d(h, w2, params["conv2_b"], padding, dilation)[:, :, :-padding]   # Chomp1d
    h = jax.nn.relu(h)
    if "down_w" in params:
        res = conv1d(x, params["down_w"], params["down_b"], 0, 1)
    else:
        res = x
    return jax.nn.relu(h + res)


# ------------------------------ parameter init -------------------------------
def init_params(key, n_inputs, n_outputs, kernel_size):
    ks = jax.random.split(key, 8)

    def nrm(kk, *shape, scale=0.01):
        return (scale * jax.random.normal(kk, shape)).astype(jnp.float32)

    p = dict(
        conv1_v=nrm(ks[0], n_outputs, n_inputs, kernel_size),       # weight_norm "v"
        conv1_g=jnp.abs(nrm(ks[1], n_outputs, 1, 1, scale=0.5)) + 0.5,
        conv1_b=nrm(ks[2], n_outputs, scale=0.1),
        conv2_v=nrm(ks[3], n_outputs, n_outputs, kernel_size),
        conv2_g=jnp.abs(nrm(ks[4], n_outputs, 1, 1, scale=0.5)) + 0.5,
        conv2_b=nrm(ks[5], n_outputs, scale=0.1),
    )
    if n_inputs != n_outputs:
        p["down_w"] = nrm(ks[6], n_outputs, n_inputs, 1)
        p["down_b"] = nrm(ks[7], n_outputs, scale=0.1)
    return p


# ----------------------------------- main ------------------------------------
if __name__ == "__main__":
    key = jax.random.PRNGKey(0)
    kx, kp = jax.random.split(key)
    x = jax.random.normal(kx, (BATCH, N_INPUTS, SEQ_LEN), jnp.float32)
    params = init_params(kp, N_INPUTS, N_OUTPUTS, KERNEL_SIZE)

    ref = temporal_block_ref(x, params, kernel_size=KERNEL_SIZE,
                             dilation=DILATION, padding=PADDING)

    # f32 operand path: exact correctness check against the XLA reference.
    out = temporal_block_forward(x, params, kernel_size=KERNEL_SIZE, stride=STRIDE,
                                 dilation=DILATION, padding=PADDING,
                                 compute_dtype=jnp.float32)
    out = jax.block_until_ready(out)
    assert out.shape == (BATCH, N_OUTPUTS, SEQ_LEN), out.shape
    assert bool(jnp.all(jnp.isfinite(out)))
    err = float(jnp.max(jnp.abs(out - ref)))
    assert err < 1e-4, f"f32 max abs err vs reference: {err}"

    # bf16 operand path (v6e/v7x MXU-native); dots accumulate in f32, epilogue f32.
    out_bf16 = temporal_block_forward(x, params, kernel_size=KERNEL_SIZE, stride=STRIDE,
                                      dilation=DILATION, padding=PADDING,
                                      compute_dtype=jnp.bfloat16)
    out_bf16 = jax.block_until_ready(out_bf16)
    err_bf16 = float(jnp.max(jnp.abs(out_bf16 - ref)))
    assert err_bf16 < 0.25, f"bf16 max abs err vs reference: {err_bf16}"

    print("KERNEL_OK")
</pallas_src>

<mosaic_0001>
module attributes {stable_mosaic.version = 11 : i64} {
  func.func @_temporal_block_kernel(%arg0: memref<40x12xf32, #tpu.memory_space<vmem>>, %arg1: memref<32x4xf32, #tpu.memory_space<vmem>>, %arg2: memref<12x8xf32, #tpu.memory_space<vmem>>, %arg3: memref<1x8xf32, #tpu.memory_space<vmem>>, %arg4: memref<3x8x8xf32, #tpu.memory_space<vmem>>, %arg5: memref<1x8xf32, #tpu.memory_space<vmem>>, %arg6: memref<4x8xf32, #tpu.memory_space<vmem>>, %arg7: memref<1x8xf32, #tpu.memory_space<vmem>>, %arg8: memref<2x16x8xf32, #tpu.memory_space<vmem>>) attributes {dimension_semantics = [], scalar_prefetch = 0 : i64, scratch_operands = 0 : i64, tpu.core_type = #tpu.core_type<tc>} {
    %c0 = arith.constant 0 : index
    %c0_0 = arith.constant 0 : index
    %0 = vector.load %arg0[%c0, %c0_0] : memref<40x12xf32, #tpu.memory_space<vmem>>, vector<40x12xf32>
    %c0_1 = arith.constant 0 : index
    %c0_2 = arith.constant 0 : index
    %1 = vector.load %arg2[%c0_1, %c0_2] : memref<12x8xf32, #tpu.memory_space<vmem>>, vector<12x8xf32>
    %cst = arith.constant dense<0.000000e+00> : vector<40x8xf32>
    %2 = tpu.matmul %0, %1, %cst {dimension_numbers = #tpu.dot_dimension_numbers<[1], [0], [0], [1], [0, 0, 1, 1], [], []>} : vector<40x12xf32>, vector<12x8xf32>, vector<40x8xf32> -> vector<40x8xf32>
    %c0_3 = arith.constant 0 : index
    %c0_4 = arith.constant 0 : index
    %3 = vector.load %arg3[%c0_3, %c0_4] : memref<1x8xf32, #tpu.memory_space<vmem>>, vector<1x8xf32>
    %4 = vector.broadcast %3 : vector<1x8xf32> to vector<40x8xf32>
    %5 = arith.addf %2, %4 : vector<40x8xf32>
    %6 = tpu.iota {dimensions = array<i32: 0>} : vector<40x8xi32>
    %c4_i32 = arith.constant 4 : i32
    %7 = vector.broadcast %c4_i32 : i32 to vector<40x8xi32>
    %8 = arith.cmpi slt, %6, %7 : vector<40x8xi32>
    %c20_i32 = arith.constant 20 : i32
    %9 = vector.broadcast %c20_i32 : i32 to vector<40x8xi32>
    %10 = arith.cmpi sge, %6, %9 : vector<40x8xi32>
    %c24_i32 = arith.constant 24 : i32
    %11 = vector.broadcast %c24_i32 : i32 to vector<40x8xi32>
    %12 = arith.cmpi slt, %6, %11 : vector<40x8xi32>
    %13 = arith.andi %10, %12 : vector<40x8xi1>
    %14 = arith.ori %8, %13 : vector<40x8xi1>
    %cst_5 = arith.constant 0.000000e+00 : f32
    %15 = vector.broadcast %cst_5 : f32 to vector<40x8xf32>
    %16 = arith.maximumf %5, %15 : vector<40x8xf32>
    %cst_6 = arith.constant 0.000000e+00 : f32
    %17 = vector.broadcast %cst_6 : f32 to vector<40x8xf32>
    %18 = arith.select %14, %17, %16 : vector<40x8xi1>, vector<40x8xf32>
    %c0_7 = arith.constant 0 : index
    %c0_8 = arith.constant 0 : index
    %c0_9 = arith.constant 0 : index
    %19 = vector.load %arg4[%c0_7, %c0_8, %c0_9] : memref<3x8x8xf32, #tpu.memory_space<vmem>>, vector<3x8x8xf32>
    %20 = vector.extract_strided_slice %19 {offsets = [0, 0, 0], sizes = [1, 8, 8], strides = [1, 1, 1]} : vector<3x8x8xf32> to vector<1x8x8xf32>
    %21 = vector.shape_cast %20 : vector<1x8x8xf32> to vector<8x8xf32>
    %cst_10 = arith.constant dense<0.000000e+00> : vector<40x8xf32>
    %22 = tpu.matmul %18, %21, %cst_10 {dimension_numbers = #tpu.dot_dimension_numbers<[1], [0], [0], [1], [0, 0, 1, 1], [], []>} : vector<40x8xf32>, vector<8x8xf32>, vector<40x8xf32> -> vector<40x8xf32>
    %23 = vector.extract_strided_slice %19 {offsets = [1, 0, 0], sizes = [1, 8, 8], strides = [1, 1, 1]} : vector<3x8x8xf32> to vector<1x8x8xf32>
    %24 = vector.shape_cast %23 : vector<1x8x8xf32> to vector<8x8xf32>
    %cst_11 = arith.constant dense<0.000000e+00> : vector<40x8xf32>
    %25 = tpu.matmul %18, %24, %cst_11 {dimension_numbers = #tpu.dot_dimension_numbers<[1], [0], [0], [1], [0, 0, 1, 1], [], []>} : vector<40x8xf32>, vector<8x8xf32>, vector<40x8xf32> -> vector<40x8xf32>
    %26 = vector.extract_strided_slice %19 {offsets = [2, 0, 0], sizes = [1, 8, 8], strides = [1, 1, 1]} : vector<3x8x8xf32> to vector<1x8x8xf32>
    %27 = vector.shape_cast %26 : vector<1x8x8xf32> to vector<8x8xf32>
    %cst_12 = arith.constant dense<0.000000e+00> : vector<40x8xf32>
    %28 = tpu.matmul %18, %27, %cst_12 {dimension_numbers = #tpu.dot_dimension_numbers<[1], [0], [0], [1], [0, 0, 1, 1], [], []>} : vector<40x8xf32>, vector<8x8xf32>, vector<40x8xf32> -> vector<40x8xf32>
    %c0_13 = arith.constant 0 : index
    %c0_14 = arith.constant 0 : index
    %29 = vector.load %arg1[%c0_13, %c0_14] : memref<32x4xf32, #tpu.memory_space<vmem>>, vector<32x4xf32>
    %c0_15 = arith.constant 0 : index
    %c0_16 = arith.constant 0 : index
    %30 = vector.load %arg6[%c0_15, %c0_16] : memref<4x8xf32, #tpu.memory_space<vmem>>, vector<4x8xf32>
    %cst_17 = arith.constant dense<0.000000e+00> : vector<32x8xf32>
    %31 = tpu.matmul %29, %30, %cst_17 {dimension_numbers = #tpu.dot_dimension_numbers<[1], [0], [0], [1], [0, 0, 1, 1], [], []>} : vector<32x4xf32>, vector<4x8xf32>, vector<32x8xf32> -> vector<32x8xf32>
    %c0_18 = arith.constant 0 : index
    %c0_19 = arith.constant 0 : index
    %32 = vector.load %arg7[%c0_18, %c0_19] : memref<1x8xf32, #tpu.memory_space<vmem>>, vector<1x8xf32>
    %33 = vector.broadcast %32 : vector<1x8xf32> to vector<32x8xf32>
    %34 = arith.addf %31, %33 : vector<32x8xf32>
    %cst_20 = arith.constant 0.000000e+00 : f32
    %35 = vector.broadcast %cst_20 : f32 to vector<16x8xf32>
    %c0_21 = arith.constant 0 : index
    %c0_22 = arith.constant 0 : index
    %36 = vector.load %arg5[%c0_21, %c0_22] : memref<1x8xf32, #tpu.memory_space<vmem>>, vector<1x8xf32>
    %37 = vector.broadcast %36 : vector<1x8xf32> to vector<16x8xf32>
    %38 = arith.addf %35, %37 : vector<16x8xf32>
    %39 = vector.extract_strided_slice %22 {offsets = [0, 0], sizes = [16, 8], strides = [1, 1]} : vector<40x8xf32> to vector<16x8xf32>
    %40 = arith.addf %38, %39 : vector<16x8xf32>
    %41 = vector.extract_strided_slice %25 {offsets = [2, 0], sizes = [16, 8], strides = [1, 1]} : vector<40x8xf32> to vector<16x8xf32>
    %42 = arith.addf %40, %41 : vector<16x8xf32>
    %43 = vector.extract_strided_slice %28 {offsets = [4, 0], sizes = [16, 8], strides = [1, 1]} : vector<40x8xf32> to vector<16x8xf32>
    %44 = arith.addf %42, %43 : vector<16x8xf32>
    %cst_23 = arith.constant 0.000000e+00 : f32
    %45 = vector.broadcast %cst_23 : f32 to vector<16x8xf32>
    %46 = arith.maximumf %44, %45 : vector<16x8xf32>
    %47 = vector.extract_strided_slice %34 {offsets = [0, 0], sizes = [16, 8], strides = [1, 1]} : vector<32x8xf32> to vector<16x8xf32>
    %48 = arith.addf %46, %47 : vector<16x8xf32>
    %cst_24 = arith.constant 0.000000e+00 : f32
    %49 = vector.broadcast %cst_24 : f32 to vector<16x8xf32>
    %50 = arith.maximumf %48, %49 : vector<16x8xf32>
    %c0_25 = arith.constant 0 : index
    %c0_26 = arith.constant 0 : index
    %c0_27 = arith.constant 0 : index
    %51 = vector.load %arg8[%c0_25, %c0_26, %c0_27] : memref<2x16x8xf32, #tpu.memory_space<vmem>>, vector<1x16x8xf32>
    %52 = vector.shape_cast %51 : vector<1x16x8xf32> to vector<16x8xf32>
    %53 = vector.shape_cast %50 : vector<16x8xf32> to vector<1x16x8xf32>
    tpu.vector_store %arg8[%c0_25, %c0_26, %c0_27], %53 {strides = array<i32>} : memref<2x16x8xf32, #tpu.memory_space<vmem>>, vector<1x16x8xf32>,
    %cst_28 = arith.constant 0.000000e+00 : f32
    %54 = vector.broadcast %cst_28 : f32 to vector<16x8xf32>
    %c0_29 = arith.constant 0 : index
    %c0_30 = arith.constant 0 : index
    %55 = vector.load %arg5[%c0_29, %c0_30] : memref<1x8xf32, #tpu.memory_space<vmem>>, vector<1x8xf32>
    %56 = vector.broadcast %55 : vector<1x8xf32> to vector<16x8xf32>
    %57 = arith.addf %54, %56 : vector<16x8xf32>
    %58 = vector.extract_strided_slice %22 {offsets = [20, 0], sizes = [16, 8], strides = [1, 1]} : vector<40x8xf32> to vector<16x8xf32>
    %59 = arith.addf %57, %58 : vector<16x8xf32>
    %60 = vector.extract_strided_slice %25 {offsets = [22, 0], sizes = [16, 8], strides = [1, 1]} : vector<40x8xf32> to vector<16x8xf32>
    %61 = arith.addf %59, %60 : vector<16x8xf32>
    %62 = vector.extract_strided_slice %28 {offsets = [24, 0], sizes = [16, 8], strides = [1, 1]} : vector<40x8xf32> to vector<16x8xf32>
    %63 = arith.addf %61, %62 : vector<16x8xf32>
    %cst_31 = arith.constant 0.000000e+00 : f32
    %64 = vector.broadcast %cst_31 : f32 to vector<16x8xf32>
    %65 = arith.maximumf %63, %64 : vector<16x8xf32>
    %66 = vector.extract_strided_slice %34 {offsets = [16, 0], sizes = [16, 8], strides = [1, 1]} : vector<32x8xf32> to vector<16x8xf32>
    %67 = arith.addf %65, %66 : vector<16x8xf32>
    %cst_32 = arith.constant 0.000000e+00 : f32
    %68 = vector.broadcast %cst_32 : f32 to vector<16x8xf32>
    %69 = arith.maximumf %67, %68 : vector<16x8xf32>
    %c1 = arith.constant 1 : index
    %c0_33 = arith.constant 0 : index
    %c0_34 = arith.constant 0 : index
    %70 = vector.load %arg8[%c1, %c0_33, %c0_34] : memref<2x16x8xf32, #tpu.memory_space<vmem>>, vector<1x16x8xf32>
    %71 = vector.shape_cast %70 : vector<1x16x8xf32> to vector<16x8xf32>
    %72 = vector.shape_cast %69 : vector<16x8xf32> to vector<1x16x8xf32>
    tpu.vector_store %arg8[%c1, %c0_33, %c0_34], %72 {strides = array<i32>} : memref<2x16x8xf32, #tpu.memory_space<vmem>>, vector<1x16x8xf32>,
    return
  }
}

</mosaic_0001>

<llo_original>
// kernel: tpu_custom_call.1
$region0: #{tpu_custom_call.1}
  #allocation0 [shape = 'u32[]', space=smem, size = 0x4, offset = 0x4, fixed_abs, tag = 'smem constant byte address 0x4 - core index']
  #allocation1 [shape = 'u32[72,128]{1,0:T(1,128)}', space=vmem, size = 0x9000, scoped, tag = 'internal scratch']
  %s0 = inlined_call_operand.vmem [shape: f32[40,12], index: 0, kind: input, shape index: {}]
  %s1 = inlined_call_operand.vmem [shape: f32[32,4], index: 1, kind: input, shape index: {}]
  %s2 = inlined_call_operand.vmem [shape: f32[12,8], index: 2, kind: input, shape index: {}]
  %s3 = inlined_call_operand.vmem [shape: f32[1,8], index: 3, kind: input, shape index: {}]
  %s4 = inlined_call_operand.vmem [shape: f32[3,8,8], index: 4, kind: input, shape index: {}]
  %s5 = inlined_call_operand.vmem [shape: f32[1,8], index: 5, kind: input, shape index: {}]
  %s6 = inlined_call_operand.vmem [shape: f32[4,8], index: 6, kind: input, shape index: {}]
  %s7 = inlined_call_operand.vmem [shape: f32[1,8], index: 7, kind: input, shape index: {}]
  %s8 = inlined_call_operand.vmem [shape: f32[2,16,8], index: 8, kind: output, shape index: {}]
  %s9 = sld [smem:[#allocation0]]
  $region42: #{tpu_custom_call.1} parent=0
    _
  %s11 = ssub.s32 1, %s9
  %s12 = scalar_select 0, %s11, %s9
  // Predicated region
  $region2: #{tpu_custom_call.1} parent=0 // pred_check
    _
  $region3: #{tpu_custom_call.1} parent=0 // pred_check_branch
    %14 = sbr.rel (0) target = $region5
  $region4: #{tpu_custom_call.1} parent=0 // pred_region
    _
  $region5: #{tpu_custom_call.1} parent=0 // pred_fallthru
    _
  // Predicated region
  $region6: #{tpu_custom_call.1} parent=0 // pred_check
    _
  $region7: #{tpu_custom_call.1} parent=0 // pred_check_branch
    %16 = sbr.rel (0) target = $region9
  $region8: #{tpu_custom_call.1} parent=0 // pred_region
    _
  $region9: #{tpu_custom_call.1} parent=0 // pred_fallthru
    _
  // Predicated region
  $region10: #{tpu_custom_call.1} parent=0 // pred_check
    _
  $region11: #{tpu_custom_call.1} parent=0 // pred_check_branch
    %18 = sbr.rel (0) target = $region13
  $region12: #{tpu_custom_call.1} parent=0 // pred_region
    _
  $region13: #{tpu_custom_call.1} parent=0 // pred_fallthru
    _
  // Predicated region
  $region14: #{tpu_custom_call.1} parent=0 // pred_check
    _
  $region15: #{tpu_custom_call.1} parent=0 // pred_check_branch
    %20 = sbr.rel (0) target = $region17
  $region16: #{tpu_custom_call.1} parent=0 // pred_region
    _
  $region17: #{tpu_custom_call.1} parent=0 // pred_fallthru
    _
  // Predicated region
  $region18: #{tpu_custom_call.1} parent=0 // pred_check
    _
  $region19: #{tpu_custom_call.1} parent=0 // pred_check_branch
    %22 = sbr.rel (0) target = $region21
  $region20: #{tpu_custom_call.1} parent=0 // pred_region
    _
  $region21: #{tpu_custom_call.1} parent=0 // pred_fallthru
    _
  // Predicated region
  $region22: #{tpu_custom_call.1} parent=0 // pred_check
    _
  $region23: #{tpu_custom_call.1} parent=0 // pred_check_branch
    %24 = sbr.rel (0) target = $region25
  $region24: #{tpu_custom_call.1} parent=0 // pred_region
    _
  $region25: #{tpu_custom_call.1} parent=0 // pred_fallthru
    _
  // Predicated region
  $region26: #{tpu_custom_call.1} parent=0 // pred_check
    _
  $region27: #{tpu_custom_call.1} parent=0 // pred_check_branch
    %26 = sbr.rel (0) target = $region29
  $region28: #{tpu_custom_call.1} parent=0 // pred_region
    _
  $region29: #{tpu_custom_call.1} parent=0 // pred_fallthru
    _
  // Predicated region
  $region30: #{tpu_custom_call.1} parent=0 // pred_check
    _
  $region31: #{tpu_custom_call.1} parent=0 // pred_check_branch
    %28 = sbr.rel (0) target = $region33
  $region32: #{tpu_custom_call.1} parent=0 // pred_region
    _
  $region33: #{tpu_custom_call.1} parent=0 // pred_fallthru
    _
  %v29 = vld [vmem:[%s0] sm:$0xff]
  %v30 = vld [vmem:[%s0 + $0x8] sm:$0xff]
  %v31 = vld [vmem:[%s0 + $0x10] sm:$0xff]
  %v32 = vld [vmem:[%s0 + $0x18] sm:$0xff]
  %v33 = vld [vmem:[%s0 + $0x20] sm:$0xff]
  %v34 = vld [vmem:[%s2] sm:$0xff]
  %v35 = vld [vmem:[%s2 + $0x8] sm:$0xf]
  %v36 = vld [vmem:[%s3] sm:$0x1]
  %v38 = vperm.slane %v36, 0
  %vm40 = vcmask 97280
  %v42 = vsel %vm40, %v29, 0
  %v45 = vsel %vm40, %v30, 0
  %v48 = vsel %vm40, %v31, 0
  %v51 = vsel %vm40, %v32, 0
  %v54 = vsel %vm40, %v33, 0
  %vm56 = vcmask 1043456
  %v58 = vsel %vm56, %v35, 0
  %60 = vmatpush.msra.mxu0 0.0
  %61 = vmatpush.msra.mxu0 0.0
  %62 = vmatpush.msra.mxu0 0.0
  %63 = vmatpush.msra.mxu0 0.0
  %64 = vmatpush.msra.mxu0 0.0
  %65 = vmatpush.msra.mxu0 0.0
  %66 = vmatpush.msra.mxu0 0.0
  %67 = vmatpush.msra.mxu0 0.0
  %68 = vmatpush.msra.mxu0 0.0
  %69 = vmatpush.msra.mxu0 0.0
  %70 = vmatpush.msra.mxu0 0.0
  %71 = vmatpush.msra.mxu0 0.0
  %72 = vmatpush.msra.mxu0 0.0
  %73 = vmatpush.msra.mxu0 0.0
  %74 = vmatpush.msra.mxu0 %v58
  %75 = vmatpush.msra.mxu0 %v34
  %76 = vmatmul.f32.gmra.mxu0 %v42
  %v77 = vpop.f32.mrf.mxu0
  %v78 = vadd.f32 %v38, %v77
  %79 = vmatmul.f32.gmra.mxu0 %v45
  %v80 = vpop.f32.mrf.mxu0
  %v81 = vadd.f32 %v38, %v80
  %82 = vmatmul.f32.gmra.mxu0 %v48
  %v83 = vpop.f32.mrf.mxu0
  %v84 = vadd.f32 %v38, %v83
  %85 = vmatmul.f32.gmra.mxu0 %v51
  %v86 = vpop.f32.mrf.mxu0
  %v87 = vadd.f32 %v38, %v86
  %88 = vmatmul.f32.gmra.mxu0 %v54
  %v89 = vpop.f32.mrf.mxu0
  %v90 = vadd.f32 %v38, %v89
  %91 = vdwg.mxu0
  %v92 = vlaneseq
  %v93 = vshrl.u32 %v92, 7
  %v94 = vadd.s32 %v93, 8
  %v95 = vadd.s32 %v93, 16
  %v96 = vadd.s32 %v93, 24
  %v97 = vadd.s32 %v93, 32
  %vm98 = vcmp.lt.s32.totalorder %v93, 4
  %vm99 = vcmp.lt.s32.totalorder %v94, 4
  %vm100 = vcmp.lt.s32.totalorder %v95, 4
  %vm101 = vcmp.lt.s32.totalorder %v96, 4
  %vm102 = vcmp.lt.s32.totalorder %v97, 4
  %vm103 = vcmp.ge.s32.totalorder %v93, 20
  %vm104 = vcmp.ge.s32.totalorder %v94, 20
  %vm105 = vcmp.ge.s32.totalorder %v95, 20
  %vm106 = vcmp.ge.s32.totalorder %v96, 20
  %vm107 = vcmp.ge.s32.totalorder %v97, 20
  %vm108 = vcmp.lt.s32.totalorder %v93, 24
  %vm109 = vcmp.lt.s32.totalorder %v94, 24
  %vm110 = vcmp.lt.s32.totalorder %v95, 24
  %vm111 = vcmp.lt.s32.totalorder %v96, 24
  %vm112 = vcmp.lt.s32.totalorder %v97, 24
  %vm113 = vmand %vm103, %vm108
  %vm114 = vmand %vm104, %vm109
  %vm115 = vmand %vm105, %vm110
  %vm116 = vmand %vm106, %vm111
  %vm117 = vmand %vm107, %vm112
  %vm118 = vmor %vm98, %vm113
  %vm119 = vmor %vm99, %vm114
  %vm120 = vmor %vm100, %vm115
  %vm121 = vmor %vm101, %vm116
  %vm122 = vmor %vm102, %vm117
  %v123 = vmax.f32 %v78, 0.0
  %v124 = vmax.f32 %v81, 0.0
  %v125 = vmax.f32 %v84, 0.0
  %v126 = vmax.f32 %v87, 0.0
  %v127 = vmax.f32 %v90, 0.0
  %v128 = vsel %vm118, 0.0, %v123
  %v129 = vsel %vm119, 0.0, %v124
  %v130 = vsel %vm120, 0.0, %v125
  %v131 = vsel %vm121, 0.0, %v126
  %v132 = vsel %vm122, 0.0, %v127
  %v133 = vld [vmem:[%s4] sm:$0xff]
  %v134 = vld [vmem:[%s4 + $0x8] sm:$0xff]
  %v135 = vld [vmem:[%s4 + $0x10] sm:$0xff]
  %vm136 = vcmask 64512
  %v138 = vsel %vm136, %v128, 0
  %v141 = vsel %vm136, %v129, 0
  %v144 = vsel %vm136, %v130, 0
  %v147 = vsel %vm136, %v131, 0
  %v150 = vsel %vm136, %v132, 0
  %152 = vmatpush.msra.mxu0 0.0
  %153 = vmatpush.msra.mxu0 0.0
  %154 = vmatpush.msra.mxu0 0.0
  %155 = vmatpush.msra.mxu0 0.0
  %156 = vmatpush.msra.mxu0 0.0
  %157 = vmatpush.msra.mxu0 0.0
  %158 = vmatpush.msra.mxu0 0.0
  %159 = vmatpush.msra.mxu0 0.0
  %160 = vmatpush.msra.mxu0 0.0
  %161 = vmatpush.msra.mxu0 0.0
  %162 = vmatpush.msra.mxu0 0.0
  %163 = vmatpush.msra.mxu0 0.0
  %164 = vmatpush.msra.mxu0 0.0
  %165 = vmatpush.msra.mxu0 0.0
  %166 = vmatpush.msra.mxu0 0.0
  %167 = vmatpush.msra.mxu0 %v133
  %168 = vmatmul.f32.gmra.mxu0 %v138
  %v169 = vpop.f32.mrf.mxu0
  %v170 = vadd.f32 0.0, %v169
  %171 = vmatmul.f32.gmra.mxu0 %v141
  %v172 = vpop.f32.mrf.mxu0
  %v173 = vadd.f32 0.0, %v172
  %174 = vmatmul.f32.gmra.mxu0 %v144
  %v175 = vpop.f32.mrf.mxu0
  %v176 = vadd.f32 0.0, %v175
  %177 = vmatmul.f32.gmra.mxu0 %v147
  %v178 = vpop.f32.mrf.mxu0
  %v179 = vadd.f32 0.0, %v178
  %180 = vmatmul.f32.gmra.mxu0 %v150
  %v181 = vpop.f32.mrf.mxu0
  %v182 = vadd.f32 0.0, %v181
  %183 = vdwg.mxu0
  %184 = vmatpush.msra.mxu0 0.0
  %185 = vmatpush.msra.mxu0 0.0
  %186 = vmatpush.msra.mxu0 0.0
  %187 = vmatpush.msra.mxu0 0.0
  %188 = vmatpush.msra.mxu0 0.0
  %189 = vmatpush.msra.mxu0 0.0
  %190 = vmatpush.msra.mxu0 0.0
  %191 = vmatpush.msra.mxu0 0.0
  %192 = vmatpush.msra.mxu0 0.0
  %193 = vmatpush.msra.mxu0 0.0
  %194 = vmatpush.msra.mxu0 0.0
  %195 = vmatpush.msra.mxu0 0.0
  %196 = vmatpush.msra.mxu0 0.0
  %197 = vmatpush.msra.mxu0 0.0
  %198 = vmatpush.msra.mxu0 0.0
  %199 = vmatpush.msra.mxu0 %v134
  %200 = vmatmul.f32.gmra.mxu0 %v138
  %v201 = vpop.f32.mrf.mxu0
  %v202 = vadd.f32 0.0, %v201
  %203 = vmatmul.f32.gmra.mxu0 %v141
  %v204 = vpop.f32.mrf.mxu0
  %v205 = vadd.f32 0.0, %v204
  %206 = vmatmul.f32.gmra.mxu0 %v144
  %v207 = vpop.f32.mrf.mxu0
  %v208 = vadd.f32 0.0, %v207
  %209 = vmatmul.f32.gmra.mxu0 %v147
  %v210 = vpop.f32.mrf.mxu0
  %v211 = vadd.f32 0.0, %v210
  %212 = vmatmul.f32.gmra.mxu0 %v150
  %v213 = vpop.f32.mrf.mxu0
  %v214 = vadd.f32 0.0, %v213
  %215 = vdwg.mxu0
  %216 = vmatpush.msra.mxu0 0.0
  %217 = vmatpush.msra.mxu0 0.0
  %218 = vmatpush.msra.mxu0 0.0
  %219 = vmatpush.msra.mxu0 0.0
  %220 = vmatpush.msra.mxu0 0.0
  %221 = vmatpush.msra.mxu0 0.0
  %222 = vmatpush.msra.mxu0 0.0
  %223 = vmatpush.msra.mxu0 0.0
  %224 = vmatpush.msra.mxu0 0.0
  %225 = vmatpush.msra.mxu0 0.0
  %226 = vmatpush.msra.mxu0 0.0
  %227 = vmatpush.msra.mxu0 0.0
  %228 = vmatpush.msra.mxu0 0.0
  %229 = vmatpush.msra.mxu0 0.0
  %230 = vmatpush.msra.mxu0 0.0
  %231 = vmatpush.msra.mxu0 %v135
  %232 = vmatmul.f32.gmra.mxu0 %v138
  %v233 = vpop.f32.mrf.mxu0
  %v234 = vadd.f32 0.0, %v233
  %235 = vmatmul.f32.gmra.mxu0 %v141
  %v236 = vpop.f32.mrf.mxu0
  %v237 = vadd.f32 0.0, %v236
  %238 = vmatmul.f32.gmra.mxu0 %v144
  %v239 = vpop.f32.mrf.mxu0
  %v240 = vadd.f32 0.0, %v239
  %241 = vmatmul.f32.gmra.mxu0 %v147
  %v242 = vpop.f32.mrf.mxu0
  %v243 = vadd.f32 0.0, %v242
  %244 = vmatmul.f32.gmra.mxu0 %v150
  %v245 = vpop.f32.mrf.mxu0
  %v246 = vadd.f32 0.0, %v245
  %247 = vdwg.mxu0
  %v248 = vld [vmem:[%s1] sm:$0xff]
  %v249 = vld [vmem:[%s1 + $0x8] sm:$0xff]
  %v250 = vld [vmem:[%s1 + $0x10] sm:$0xff]
  %v251 = vld [vmem:[%s1 + $0x18] sm:$0xff]
  %v252 = vld [vmem:[%s6] sm:$0xf]
  %v253 = vld [vmem:[%s7] sm:$0x1]
  %v255 = vperm.slane %v253, 0
  %vm257 = vcmask 31744
  %v259 = vsel %vm257, %v248, 0
  %v262 = vsel %vm257, %v249, 0
  %v265 = vsel %vm257, %v250, 0
  %v268 = vsel %vm257, %v251, 0
  %v271 = vsel %vm56, %v252, 0
  %273 = vmatpush.msra.mxu0 0.0
  %274 = vmatpush.msra.mxu0 0.0
  %275 = vmatpush.msra.mxu0 0.0
  %276 = vmatpush.msra.mxu0 0.0
  %277 = vmatpush.msra.mxu0 0.0
  %278 = vmatpush.msra.mxu0 0.0
  %279 = vmatpush.msra.mxu0 0.0
  %280 = vmatpush.msra.mxu0 0.0
  %281 = vmatpush.msra.mxu0 0.0
  %282 = vmatpush.msra.mxu0 0.0
  %283 = vmatpush.msra.mxu0 0.0
  %284 = vmatpush.msra.mxu0 0.0
  %285 = vmatpush.msra.mxu0 0.0
  %286 = vmatpush.msra.mxu0 0.0
  %287 = vmatpush.msra.mxu0 0.0
  %288 = vmatpush.msra.mxu0 %v271
  %289 = vmatmul.f32.gmra.mxu0 %v259
  %v290 = vpop.f32.mrf.mxu0
  %v291 = vadd.f32 %v255, %v290
  %292 = vmatmul.f32.gmra.mxu0 %v262
  %v293 = vpop.f32.mrf.mxu0
  %v294 = vadd.f32 %v255, %v293
  %295 = vmatmul.f32.gmra.mxu0 %v265
  %v296 = vpop.f32.mrf.mxu0
  %v297 = vadd.f32 %v255, %v296
  %298 = vmatmul.f32.gmra.mxu0 %v268
  %v299 = vpop.f32.mrf.mxu0
  %v300 = vadd.f32 %v255, %v299
  %301 = vdwg.mxu0
  %v302 = vld [vmem:[%s5] sm:$0x1]
  %v304 = vperm.slane %v302, 0
  %v306 = vadd.f32 %v304, 0.0
  %v307 = vadd.f32 %v306, %v170
  %v308 = vadd.f32 %v306, %v173
  %vm312 = vcmask 1045504
  %v313 = vrot.slane %v202, 2
  %v314 = vrot.slane %v205, 2
  %v315 = vsel %vm312, %v313, %v314
  %v316 = vrot.slane %v208, 2
  %v317 = vsel %vm312, %v314, %v316
  %v320 = vadd.f32 %v307, %v315
  %v321 = vadd.f32 %v308, %v317
  %v325 = vrot.slane %v234, 4
  %v326 = vrot.slane %v237, 4
  %v327 = vsel %vm56, %v325, %v326
  %v328 = vrot.slane %v240, 4
  %v329 = vsel %vm56, %v326, %v328
  %v332 = vadd.f32 %v320, %v327
  %v333 = vadd.f32 %v321, %v329
  %v334 = vmax.f32 %v332, 0.0
  %v335 = vmax.f32 %v333, 0.0
  %v336 = vadd.f32 %v334, %v291
  %v337 = vadd.f32 %v335, %v294
  %v338 = vmax.f32 %v336, 0.0
  %v339 = vmax.f32 %v337, 0.0
  %340 = vst.msk [vmem:[%s8] sm:$0xff] %vm136, %v338
  %341 = vst.msk [vmem:[%s8 + $0x8] sm:$0xff] %vm136, %v339
  %v342 = vld [vmem:[%s5] sm:$0x1]
  %v344 = vperm.slane %v342, 0
  %v346 = vadd.f32 %v344, 0.0
  %v347 = vadd.f32 %v346, %v176
  %v348 = vadd.f32 %v346, %v179
  %v349 = vadd.f32 %v346, %v182
  %v352 = vrot.slane %v211, 2
  %v353 = vsel %vm312, %v316, %v352
  %v354 = vrot.slane %v214, 2
  %v355 = vsel %vm312, %v352, %v354
  %v359 = vadd.f32 %v347, %v353
  %v360 = vadd.f32 %v348, %v355
  %v361 = vadd.f32 %v349, %v354
  %v364 = vrot.slane %v243, 4
  %v365 = vrot.slane %v246, 4
  %v366 = vsel %vm56, %v364, %v365
  %v370 = vadd.f32 %v359, %v364
  %v371 = vadd.f32 %v360, %v366
  %v372 = vadd.f32 %v361, %v365
  %v373 = vmax.f32 %v370, 0.0
  %v374 = vmax.f32 %v371, 0.0
  %v375 = vmax.f32 %v372, 0.0
  %v378 = vrot.slane %v297, 4
  %v379 = vrot.slane %v300, 4
  %v380 = vsel %vm56, %v378, %v379
  %v384 = vadd.f32 %v373, %v378
  %v385 = vadd.f32 %v374, %v380
  %v386 = vadd.f32 %v375, %v379
  %v387 = vmax.f32 %v384, 0.0
  %v388 = vmax.f32 %v385, 0.0
  %v389 = vmax.f32 %v386, 0.0
  %s390 = scalar_lea.vmem %s8, 16
  %vm391 = vcmask 64516
  %392 = vst.msk [vmem:[%s390 - $0x4] sm:$0xf0] %vm391, %v387
  %393 = vst.msk [vmem:[%s390 + $0x4] sm:$0xff] %vm136, %v388
  %vm394 = vcmask 60416
  %395 = vst.msk [vmem:[%s390 + $0xc] sm:$0xf] %vm394, %v389
  // Predicated region
  $region34: #{tpu_custom_call.1} parent=0 // pred_check
    _
  $region35: #{tpu_custom_call.1} parent=0 // pred_check_branch
    %397 = sbr.rel (0) target = $region37
  $region36: #{tpu_custom_call.1} parent=0 // pred_region
    _
  $region37: #{tpu_custom_call.1} parent=0 // pred_fallthru
    _
  // Predicated region
  $region38: #{tpu_custom_call.1} parent=0 // pred_check
    _
  $region39: #{tpu_custom_call.1} parent=0 // pred_check_branch
    %399 = sbr.rel (0) target = $region41
  $region40: #{tpu_custom_call.1} parent=0 // pred_region
    _
  $region41: #{tpu_custom_call.1} parent=0 // pred_fallthru
    _

</llo_original>
